<compile_context>
chip_gen: v7x
topology: tpu7x:2x2x1
jax: 0.10.0
libtpu: 0.0.40
codegen_flags: <defaults>
</compile_context>

<pallas_src>
import functools

import jax
import jax.numpy as jnp
import numpy as np
from jax.experimental import pallas as pl
from jax.experimental.pallas import tpu as pltpu


def _make_kernel(NB, C, H, W, K, PAD):
    HW = H * W

    def _shift(v, d):
        # y[..., p] = v[..., (p + d) % HW]   (pltpu.roll == jnp.roll semantics)
        if d == 0:
            return v
        return pltpu.roll(v, (-d) % HW, axis=1)

    def kernel(w_ref, x_ref, o_ref):
        x = x_ref[...].astype(jnp.float32)            # (NB, C, HW)
        avg = jnp.mean(x, axis=1)                     # (NB, HW)
        mx = jnp.max(x, axis=1)                       # (NB, HW)

        # Flattened position -> border masks. Row tests use pos directly
        # (row = pos // W is never materialized), col = pos % W.
        pos = jax.lax.broadcasted_iota(jnp.int32, (NB, HW), 1)
        col = pos % W

        # Hoist all scalar weight reads out of the tap loop.
        w_avg = [[w_ref[ky * K + kx] for kx in range(K)] for ky in range(K)]
        w_max = [[w_ref[K * K + ky * K + kx] for kx in range(K)]
                 for ky in range(K)]

        partials = []
        for ky in range(K):
            dy = ky - PAD
            for kx in range(K):
                dx = kx - PAD
                d = dy * W + dx
                term = (w_avg[ky][kx] * _shift(avg, d)
                        + w_max[ky][kx] * _shift(mx, d))
                conds = []
                if dy < 0:
                    conds.append(pos >= (-dy) * W)        # row + dy >= 0
                elif dy > 0:
                    conds.append(pos < (H - dy) * W)      # row + dy < H
                if dx < 0:
                    conds.append(col >= -dx)              # col + dx >= 0
                elif dx > 0:
                    conds.append(col < W - dx)            # col + dx < W
                if conds:
                    valid = functools.reduce(jnp.logical_and, conds)
                    term = jnp.where(valid, term, 0.0)
                partials.append(term)

        # Balanced tree reduction -> independent adds (VALU can co-issue).
        while len(partials) > 1:
            nxt = [partials[i] + partials[i + 1]
                   for i in range(0, len(partials) - 1, 2)]
            if len(partials) % 2:
                nxt.append(partials[-1])
            partials = nxt

        o_ref[...] = partials[0].astype(o_ref.dtype)

    return kernel


def _pick_block_n(n, bytes_per_batch, budget=8 * 1024 * 1024):
    """Largest divisor of n whose input block stays well inside scoped VMEM
    (conservative for v7x's 64 MiB physical / 32 MiB default scoped VMEM)."""
    bn = n
    while bn > 1 and bn * bytes_per_batch > budget:
        bn -= 1
        while n % bn:
            bn -= 1
    return bn


def spatial_attention(x, w, kernel_size=3, block_n=None):
    """x: (N, C, H, W); w: (1, 2, K, K) OIHW conv weight. Returns (N, 1, H, W)."""
    assert kernel_size in (3, 7), "kernel size must be 3 or 7"
    pad = 3 if kernel_size == 7 else 1
    N, C, H, W = x.shape
    K = kernel_size
    HW = H * W

    if block_n is None:
        block_n = _pick_block_n(N, C * HW * x.dtype.itemsize)
    assert N % block_n == 0

    x_flat = x.reshape(N, C, HW)                       # lane dim = H*W (lane-dense)
    w_flat = w.reshape(-1).astype(jnp.float32)         # (2*K*K,) SMEM scalars

    kernel = _make_kernel(block_n, C, H, W, K, pad)

    out_flat = pl.pallas_call(
        kernel,
        out_shape=jax.ShapeDtypeStruct((N, HW), x.dtype),
        grid=(N // block_n,),
        in_specs=[
            pl.BlockSpec(memory_space=pltpu.MemorySpace.SMEM),     # weights
            pl.BlockSpec((block_n, C, HW), lambda n: (n, 0, 0)),   # x batch tile
        ],
        out_specs=pl.BlockSpec((block_n, HW), lambda n: (n, 0)),
        compiler_params=pltpu.CompilerParams(
            dimension_semantics=("parallel",),   # batch tiles are independent
        ),
    )(w_flat, x_flat)

    return out_flat.reshape(N, 1, H, W)


def spatial_attention_ref(x, w, kernel_size=3):
    pad = 3 if kernel_size == 7 else 1
    avg_out = jnp.mean(x, axis=1, keepdims=True)
    max_out = jnp.max(x, axis=1, keepdims=True)
    feat = jnp.concatenate([avg_out, max_out], axis=1)
    return jax.lax.conv_general_dilated(
        feat, w, window_strides=(1, 1), padding=((pad, pad), (pad, pad)),
        dimension_numbers=("NCHW", "OIHW", "NCHW"))


if __name__ == "__main__":
    key = jax.random.PRNGKey(0)
    kx_key, kw_key = jax.random.split(key)

    N, C, H, W = 2, 4, 16, 16
    kernel_size = 3

    x = jax.random.normal(kx_key, (N, C, H, W), dtype=jnp.float32)
    # deterministic conv1 weight, PyTorch shape (out=1, in=2, K, K), no bias
    w = jax.random.normal(kw_key, (1, 2, kernel_size, kernel_size),
                          dtype=jnp.float32) * 0.1

    out = spatial_attention(x, w, kernel_size)
    out = jax.block_until_ready(out)

    ref = jax.block_until_ready(spatial_attention_ref(x, w, kernel_size))
    np.testing.assert_allclose(np.asarray(out), np.asarray(ref),
                               rtol=1e-5, atol=1e-5)

    print("KERNEL_OK")
</pallas_src>

<mosaic_0001>
module attributes {stable_mosaic.version = 11 : i64} {
  func.func @kernel(%arg0: i32, %arg1: memref<18xf32, #tpu.memory_space<smem>>, %arg2: memref<2x4x256xf32, #tpu.memory_space<vmem>>, %arg3: memref<2x256xf32, #tpu.memory_space<vmem>>) attributes {dimension_semantics = [#tpu.dimension_semantics<parallel>], iteration_bounds = array<i64: 1>, scalar_prefetch = 0 : i64, scratch_operands = 0 : i64, tpu.core_type = #tpu.core_type<tc>, window_params = [{transform_indices = @transform_0, window_bounds = array<i64: 18>}, {transform_indices = @transform_1, window_bounds = array<i64: 2, 4, 256>}, {transform_indices = @transform_2, window_bounds = array<i64: 2, 256>}]} {
    %c0 = arith.constant 0 : index
    %c0_0 = arith.constant 0 : index
    %c0_1 = arith.constant 0 : index
    %0 = vector.load %arg2[%c0, %c0_0, %c0_1] : memref<2x4x256xf32, #tpu.memory_space<vmem>>, vector<2x4x256xf32>
    %cst = arith.constant dense<0.000000e+00> : vector<2x256xf32>
    %1 = vector.multi_reduction <add>, %0, %cst [1] : vector<2x4x256xf32> to vector<2x256xf32>
    %cst_2 = arith.constant 4.000000e+00 : f32
    %2 = vector.broadcast %cst_2 : f32 to vector<2x256xf32>
    %3 = arith.divf %1, %2 : vector<2x256xf32>
    %cst_3 = arith.constant dense<0xFF800000> : vector<2x256xf32>
    %4 = vector.multi_reduction <maximumf>, %0, %cst_3 [1] : vector<2x4x256xf32> to vector<2x256xf32>
    %5 = tpu.iota {dimensions = array<i32: 1>} : vector<2x256xi32>
    %c16_i32 = arith.constant 16 : i32
    %c0_i32 = arith.constant 0 : i32
    %6 = arith.cmpi eq, %c16_i32, %c0_i32 : i32
    %c1_i32 = arith.constant 1 : i32
    %7 = arith.select %6, %c1_i32, %c16_i32 : i32
    %8 = vector.broadcast %7 : i32 to vector<2x256xi32>
    %9 = arith.remsi %5, %8 : vector<2x256xi32>
    %c0_i32_4 = arith.constant 0 : i32
    %10 = vector.broadcast %c0_i32_4 : i32 to vector<2x256xi32>
    %11 = arith.cmpi ne, %9, %10 : vector<2x256xi32>
    %c0_i32_5 = arith.constant 0 : i32
    %12 = vector.broadcast %c0_i32_5 : i32 to vector<2x256xi32>
    %13 = arith.cmpi slt, %9, %12 : vector<2x256xi32>
    %c0_i32_6 = arith.constant 0 : i32
    %14 = arith.cmpi slt, %7, %c0_i32_6 : i32
    %15 = vector.broadcast %14 : i1 to vector<2x256xi1>
    %16 = vector.broadcast %15 : vector<2x256xi1> to vector<2x256xi1>
    %17 = arith.xori %13, %16 : vector<2x256xi1>
    %18 = arith.andi %17, %11 : vector<2x256xi1>
    %19 = vector.broadcast %7 : i32 to vector<2x256xi32>
    %20 = arith.addi %9, %19 : vector<2x256xi32>
    %21 = arith.select %18, %20, %9 : vector<2x256xi1>, vector<2x256xi32>
    %c0_7 = arith.constant 0 : index
    %22 = memref.load %arg1[%c0_7] : memref<18xf32, #tpu.memory_space<smem>>
    %c1 = arith.constant 1 : index
    %23 = memref.load %arg1[%c1] : memref<18xf32, #tpu.memory_space<smem>>
    %c2 = arith.constant 2 : index
    %24 = memref.load %arg1[%c2] : memref<18xf32, #tpu.memory_space<smem>>
    %c3 = arith.constant 3 : index
    %25 = memref.load %arg1[%c3] : memref<18xf32, #tpu.memory_space<smem>>
    %c4 = arith.constant 4 : index
    %26 = memref.load %arg1[%c4] : memref<18xf32, #tpu.memory_space<smem>>
    %c5 = arith.constant 5 : index
    %27 = memref.load %arg1[%c5] : memref<18xf32, #tpu.memory_space<smem>>
    %c6 = arith.constant 6 : index
    %28 = memref.load %arg1[%c6] : memref<18xf32, #tpu.memory_space<smem>>
    %c7 = arith.constant 7 : index
    %29 = memref.load %arg1[%c7] : memref<18xf32, #tpu.memory_space<smem>>
    %c8 = arith.constant 8 : index
    %30 = memref.load %arg1[%c8] : memref<18xf32, #tpu.memory_space<smem>>
    %c9 = arith.constant 9 : index
    %31 = memref.load %arg1[%c9] : memref<18xf32, #tpu.memory_space<smem>>
    %c10 = arith.constant 10 : index
    %32 = memref.load %arg1[%c10] : memref<18xf32, #tpu.memory_space<smem>>
    %c11 = arith.constant 11 : index
    %33 = memref.load %arg1[%c11] : memref<18xf32, #tpu.memory_space<smem>>
    %c12 = arith.constant 12 : index
    %34 = memref.load %arg1[%c12] : memref<18xf32, #tpu.memory_space<smem>>
    %c13 = arith.constant 13 : index
    %35 = memref.load %arg1[%c13] : memref<18xf32, #tpu.memory_space<smem>>
    %c14 = arith.constant 14 : index
    %36 = memref.load %arg1[%c14] : memref<18xf32, #tpu.memory_space<smem>>
    %c15 = arith.constant 15 : index
    %37 = memref.load %arg1[%c15] : memref<18xf32, #tpu.memory_space<smem>>
    %c16 = arith.constant 16 : index
    %38 = memref.load %arg1[%c16] : memref<18xf32, #tpu.memory_space<smem>>
    %c17 = arith.constant 17 : index
    %39 = memref.load %arg1[%c17] : memref<18xf32, #tpu.memory_space<smem>>
    %c17_i32 = arith.constant 17 : i32
    %40 = tpu.dynamic_rotate %3 by %c17_i32 dim 1 : vector<2x256xf32>, i32 -> vector<2x256xf32>
    %41 = vector.broadcast %22 : f32 to vector<2x256xf32>
    %42 = arith.mulf %41, %40 : vector<2x256xf32>
    %c17_i32_8 = arith.constant 17 : i32
    %43 = tpu.dynamic_rotate %4 by %c17_i32_8 dim 1 : vector<2x256xf32>, i32 -> vector<2x256xf32>
    %44 = vector.broadcast %31 : f32 to vector<2x256xf32>
    %45 = arith.mulf %44, %43 : vector<2x256xf32>
    %46 = arith.addf %42, %45 : vector<2x256xf32>
    %c16_i32_9 = arith.constant 16 : i32
    %47 = vector.broadcast %c16_i32_9 : i32 to vector<2x256xi32>
    %48 = arith.cmpi sge, %5, %47 : vector<2x256xi32>
    %c1_i32_10 = arith.constant 1 : i32
    %49 = vector.broadcast %c1_i32_10 : i32 to vector<2x256xi32>
    %50 = arith.cmpi sge, %21, %49 : vector<2x256xi32>
    %51 = arith.andi %48, %50 : vector<2x256xi1>
    %cst_11 = arith.constant 0.000000e+00 : f32
    %52 = vector.broadcast %cst_11 : f32 to vector<2x256xf32>
    %53 = arith.select %51, %46, %52 : vector<2x256xi1>, vector<2x256xf32>
    %c16_i32_12 = arith.constant 16 : i32
    %54 = tpu.dynamic_rotate %3 by %c16_i32_12 dim 1 : vector<2x256xf32>, i32 -> vector<2x256xf32>
    %55 = vector.broadcast %23 : f32 to vector<2x256xf32>
    %56 = arith.mulf %55, %54 : vector<2x256xf32>
    %c16_i32_13 = arith.constant 16 : i32
    %57 = tpu.dynamic_rotate %4 by %c16_i32_13 dim 1 : vector<2x256xf32>, i32 -> vector<2x256xf32>
    %58 = vector.broadcast %32 : f32 to vector<2x256xf32>
    %59 = arith.mulf %58, %57 : vector<2x256xf32>
    %60 = arith.addf %56, %59 : vector<2x256xf32>
    %c16_i32_14 = arith.constant 16 : i32
    %61 = vector.broadcast %c16_i32_14 : i32 to vector<2x256xi32>
    %62 = arith.cmpi sge, %5, %61 : vector<2x256xi32>
    %cst_15 = arith.constant 0.000000e+00 : f32
    %63 = vector.broadcast %cst_15 : f32 to vector<2x256xf32>
    %64 = arith.select %62, %60, %63 : vector<2x256xi1>, vector<2x256xf32>
    %c15_i32 = arith.constant 15 : i32
    %65 = tpu.dynamic_rotate %3 by %c15_i32 dim 1 : vector<2x256xf32>, i32 -> vector<2x256xf32>
    %66 = vector.broadcast %24 : f32 to vector<2x256xf32>
    %67 = arith.mulf %66, %65 : vector<2x256xf32>
    %c15_i32_16 = arith.constant 15 : i32
    %68 = tpu.dynamic_rotate %4 by %c15_i32_16 dim 1 : vector<2x256xf32>, i32 -> vector<2x256xf32>
    %69 = vector.broadcast %33 : f32 to vector<2x256xf32>
    %70 = arith.mulf %69, %68 : vector<2x256xf32>
    %71 = arith.addf %67, %70 : vector<2x256xf32>
    %c16_i32_17 = arith.constant 16 : i32
    %72 = vector.broadcast %c16_i32_17 : i32 to vector<2x256xi32>
    %73 = arith.cmpi sge, %5, %72 : vector<2x256xi32>
    %c15_i32_18 = arith.constant 15 : i32
    %74 = vector.broadcast %c15_i32_18 : i32 to vector<2x256xi32>
    %75 = arith.cmpi slt, %21, %74 : vector<2x256xi32>
    %76 = arith.andi %73, %75 : vector<2x256xi1>
    %cst_19 = arith.constant 0.000000e+00 : f32
    %77 = vector.broadcast %cst_19 : f32 to vector<2x256xf32>
    %78 = arith.select %76, %71, %77 : vector<2x256xi1>, vector<2x256xf32>
    %c1_i32_20 = arith.constant 1 : i32
    %79 = tpu.dynamic_rotate %3 by %c1_i32_20 dim 1 : vector<2x256xf32>, i32 -> vector<2x256xf32>
    %80 = vector.broadcast %25 : f32 to vector<2x256xf32>
    %81 = arith.mulf %80, %79 : vector<2x256xf32>
    %c1_i32_21 = arith.constant 1 : i32
    %82 = tpu.dynamic_rotate %4 by %c1_i32_21 dim 1 : vector<2x256xf32>, i32 -> vector<2x256xf32>
    %83 = vector.broadcast %34 : f32 to vector<2x256xf32>
    %84 = arith.mulf %83, %82 : vector<2x256xf32>
    %85 = arith.addf %81, %84 : vector<2x256xf32>
    %c1_i32_22 = arith.constant 1 : i32
    %86 = vector.broadcast %c1_i32_22 : i32 to vector<2x256xi32>
    %87 = arith.cmpi sge, %21, %86 : vector<2x256xi32>
    %cst_23 = arith.constant 0.000000e+00 : f32
    %88 = vector.broadcast %cst_23 : f32 to vector<2x256xf32>
    %89 = arith.select %87, %85, %88 : vector<2x256xi1>, vector<2x256xf32>
    %90 = vector.broadcast %26 : f32 to vector<2x256xf32>
    %91 = arith.mulf %90, %3 : vector<2x256xf32>
    %92 = vector.broadcast %35 : f32 to vector<2x256xf32>
    %93 = arith.mulf %92, %4 : vector<2x256xf32>
    %94 = arith.addf %91, %93 : vector<2x256xf32>
    %c255_i32 = arith.constant 255 : i32
    %95 = tpu.dynamic_rotate %3 by %c255_i32 dim 1 : vector<2x256xf32>, i32 -> vector<2x256xf32>
    %96 = vector.broadcast %27 : f32 to vector<2x256xf32>
    %97 = arith.mulf %96, %95 : vector<2x256xf32>
    %c255_i32_24 = arith.constant 255 : i32
    %98 = tpu.dynamic_rotate %4 by %c255_i32_24 dim 1 : vector<2x256xf32>, i32 -> vector<2x256xf32>
    %99 = vector.broadcast %36 : f32 to vector<2x256xf32>
    %100 = arith.mulf %99, %98 : vector<2x256xf32>
    %101 = arith.addf %97, %100 : vector<2x256xf32>
    %c15_i32_25 = arith.constant 15 : i32
    %102 = vector.broadcast %c15_i32_25 : i32 to vector<2x256xi32>
    %103 = arith.cmpi slt, %21, %102 : vector<2x256xi32>
    %cst_26 = arith.constant 0.000000e+00 : f32
    %104 = vector.broadcast %cst_26 : f32 to vector<2x256xf32>
    %105 = arith.select %103, %101, %104 : vector<2x256xi1>, vector<2x256xf32>
    %c241_i32 = arith.constant 241 : i32
    %106 = tpu.dynamic_rotate %3 by %c241_i32 dim 1 : vector<2x256xf32>, i32 -> vector<2x256xf32>
    %107 = vector.broadcast %28 : f32 to vector<2x256xf32>
    %108 = arith.mulf %107, %106 : vector<2x256xf32>
    %c241_i32_27 = arith.constant 241 : i32
    %109 = tpu.dynamic_rotate %4 by %c241_i32_27 dim 1 : vector<2x256xf32>, i32 -> vector<2x256xf32>
    %110 = vector.broadcast %37 : f32 to vector<2x256xf32>
    %111 = arith.mulf %110, %109 : vector<2x256xf32>
    %112 = arith.addf %108, %111 : vector<2x256xf32>
    %c240_i32 = arith.constant 240 : i32
    %113 = vector.broadcast %c240_i32 : i32 to vector<2x256xi32>
    %114 = arith.cmpi slt, %5, %113 : vector<2x256xi32>
    %c1_i32_28 = arith.constant 1 : i32
    %115 = vector.broadcast %c1_i32_28 : i32 to vector<2x256xi32>
    %116 = arith.cmpi sge, %21, %115 : vector<2x256xi32>
    %117 = arith.andi %114, %116 : vector<2x256xi1>
    %cst_29 = arith.constant 0.000000e+00 : f32
    %118 = vector.broadcast %cst_29 : f32 to vector<2x256xf32>
    %119 = arith.select %117, %112, %118 : vector<2x256xi1>, vector<2x256xf32>
    %c240_i32_30 = arith.constant 240 : i32
    %120 = tpu.dynamic_rotate %3 by %c240_i32_30 dim 1 : vector<2x256xf32>, i32 -> vector<2x256xf32>
    %121 = vector.broadcast %29 : f32 to vector<2x256xf32>
    %122 = arith.mulf %121, %120 : vector<2x256xf32>
    %c240_i32_31 = arith.constant 240 : i32
    %123 = tpu.dynamic_rotate %4 by %c240_i32_31 dim 1 : vector<2x256xf32>, i32 -> vector<2x256xf32>
    %124 = vector.broadcast %38 : f32 to vector<2x256xf32>
    %125 = arith.mulf %124, %123 : vector<2x256xf32>
    %126 = arith.addf %122, %125 : vector<2x256xf32>
    %c240_i32_32 = arith.constant 240 : i32
    %127 = vector.broadcast %c240_i32_32 : i32 to vector<2x256xi32>
    %128 = arith.cmpi slt, %5, %127 : vector<2x256xi32>
    %cst_33 = arith.constant 0.000000e+00 : f32
    %129 = vector.broadcast %cst_33 : f32 to vector<2x256xf32>
    %130 = arith.select %128, %126, %129 : vector<2x256xi1>, vector<2x256xf32>
    %c239_i32 = arith.constant 239 : i32
    %131 = tpu.dynamic_rotate %3 by %c239_i32 dim 1 : vector<2x256xf32>, i32 -> vector<2x256xf32>
    %132 = vector.broadcast %30 : f32 to vector<2x256xf32>
    %133 = arith.mulf %132, %131 : vector<2x256xf32>
    %c239_i32_34 = arith.constant 239 : i32
    %134 = tpu.dynamic_rotate %4 by %c239_i32_34 dim 1 : vector<2x256xf32>, i32 -> vector<2x256xf32>
    %135 = vector.broadcast %39 : f32 to vector<2x256xf32>
    %136 = arith.mulf %135, %134 : vector<2x256xf32>
    %137 = arith.addf %133, %136 : vector<2x256xf32>
    %c240_i32_35 = arith.constant 240 : i32
    %138 = vector.broadcast %c240_i32_35 : i32 to vector<2x256xi32>
    %139 = arith.cmpi slt, %5, %138 : vector<2x256xi32>
    %c15_i32_36 = arith.constant 15 : i32
    %140 = vector.broadcast %c15_i32_36 : i32 to vector<2x256xi32>
    %141 = arith.cmpi slt, %21, %140 : vector<2x256xi32>
    %142 = arith.andi %139, %141 : vector<2x256xi1>
    %cst_37 = arith.constant 0.000000e+00 : f32
    %143 = vector.broadcast %cst_37 : f32 to vector<2x256xf32>
    %144 = arith.select %142, %137, %143 : vector<2x256xi1>, vector<2x256xf32>
    %145 = arith.addf %53, %64 : vector<2x256xf32>
    %146 = arith.addf %78, %89 : vector<2x256xf32>
    %147 = arith.addf %94, %105 : vector<2x256xf32>
    %148 = arith.addf %119, %130 : vector<2x256xf32>
    %149 = arith.addf %145, %146 : vector<2x256xf32>
    %150 = arith.addf %147, %148 : vector<2x256xf32>
    %151 = arith.addf %149, %150 : vector<2x256xf32>
    %152 = arith.addf %151, %144 : vector<2x256xf32>
    %c0_38 = arith.constant 0 : index
    %c0_39 = arith.constant 0 : index
    %153 = vector.load %arg3[%c0_38, %c0_39] : memref<2x256xf32, #tpu.memory_space<vmem>>, vector<2x256xf32>
    tpu.vector_store %arg3[%c0_38, %c0_39], %152 {strides = array<i32>} : memref<2x256xf32, #tpu.memory_space<vmem>>, vector<2x256xf32>,
    return
  }
  func.func @transform_0(%arg0: i32) -> i32 {
    %c0_i32 = arith.constant 0 : i32
    %c0_i32_0 = arith.constant 0 : i32
    return %c0_i32 : i32
  }
  func.func @transform_1(%arg0: i32) -> (i32, i32, i32) {
    %c0_i32 = arith.constant 0 : i32
    %c0_i32_0 = arith.constant 0 : i32
    %c0_i32_1 = arith.constant 0 : i32
    return %arg0, %c0_i32, %c0_i32_0 : i32, i32, i32
  }
  func.func @transform_2(%arg0: i32) -> (i32, i32) {
    %c0_i32 = arith.constant 0 : i32
    %c0_i32_0 = arith.constant 0 : i32
    return %arg0, %c0_i32 : i32, i32
  }
}

</mosaic_0001>

<llo_original>
// kernel: tpu_custom_call.1
$region0: #{tpu_custom_call.1}
  #allocation0 [shape = 'u32[]', space=smem, size = 0x4, offset = 0x4, fixed_abs, tag = 'smem constant byte address 0x4 - core index']
  #allocation1 [shape = 'u32[144,128]{1,0:T(1,128)}', space=vmem, size = 0x12000, scoped, tag = 'internal scratch']
  %s0 = inlined_call_operand.hbm [shape: f32[18], index: 0, kind: input, shape index: {}]
  %s1 = inlined_call_operand.hbm [shape: f32[2,4,256], index: 1, kind: input, shape index: {}]
  %s2 = inlined_call_operand.hbm [shape: f32[2,256], index: 2, kind: output, shape index: {}]
  %s3 = sld [smem:[#allocation0]]
  $region26: #{tpu_custom_call.1} parent=0
    _
  %s5 = ssub.s32 1, %s3
  %s6 = scalar_select 0, %s5, %s3
  $region1: #{tpu_custom_call.1} parent=0
    #allocation2 [shape = 'u8[512]{0}', space=smem, size = 0x200, scoped, tag = 'input window, operand 0, single buffered']
    #allocation3 [shape = 's32[1]{0}', space=sflag, size = 0x4, scoped, tag = 'scoped memory for tpu_custom_call.1']
    #allocation4 [shape = 's32[1]{0}', space=sflag, size = 0x4, scoped, tag = 'scoped memory for tpu_custom_call.1']
    #allocation5 [shape = 's32[1]{0}', space=sflag, size = 0x4, scoped, tag = 'scoped memory for tpu_custom_call.1']
    #allocation6 [shape = 'u8[8192]{0}', space=vmem, size = 0x2000, scoped, tag = 'input window, operand 1, single buffered']
    #allocation7 [shape = 'u8[2048]{0}', space=vmem, size = 0x800, scoped, tag = 'output window, operand 0, single buffered']
    %7 = vsyncpa [#allocation5], 0
    %8 = vsyncpa [#allocation3], 0
    %9 = vsyncpa [#allocation4], 0
    // Predicated region
    $region2: #{tpu_custom_call.1} parent=1 // pred_check
      _
    $region3: #{tpu_custom_call.1} parent=1 // pred_check_branch
      %11 = sbr.rel (0) target = $region5
    $region4: #{tpu_custom_call.1} parent=1 // pred_region
      %s13 = ssub.s32 16, 16
      %14 = vsyncadd [#allocation5], %s13
      %17 = dma.hbm_to_smem %s0, 16, [#allocation2], [#allocation5]
    $region5: #{tpu_custom_call.1} parent=1 // pred_fallthru
      _
    // Predicated region
    $region6: #{tpu_custom_call.1} parent=1 // pred_check
      _
    $region7: #{tpu_custom_call.1} parent=1 // pred_check_branch
      %19 = sbr.rel (0) target = $region9
    $region8: #{tpu_custom_call.1} parent=1 // pred_region
      %s21 = ssub.s32 256, 256
      %22 = vsyncadd [#allocation3], %s21
      %s23 = sshll.u32 [#allocation6], 4
      %s24 = int_to_ptr.vmem [resolvable:$true] %s23
      %29 = dma.hbm_to_vmem [thread:$0]  %s1, 256, %s24, [#allocation3], 128, 128, 8
    $region9: #{tpu_custom_call.1} parent=1 // pred_fallthru
      _
    // Predicated region
    $region10: #{tpu_custom_call.1} parent=1 // pred_check
      _
    $region11: #{tpu_custom_call.1} parent=1 // pred_check_branch
      %31 = sbr.rel (0) target = $region13
    $region12: #{tpu_custom_call.1} parent=1 // pred_region
      %32 = dma.done [#allocation5], 16
    $region13: #{tpu_custom_call.1} parent=1 // pred_fallthru
      _
    // Predicated region
    $region14: #{tpu_custom_call.1} parent=1 // pred_check
      _
    $region15: #{tpu_custom_call.1} parent=1 // pred_check_branch
      %34 = sbr.rel (0) target = $region17
    $region16: #{tpu_custom_call.1} parent=1 // pred_region
      %35 = dma.done [#allocation3], 256
    $region17: #{tpu_custom_call.1} parent=1 // pred_fallthru
      _
    %36 = sfence
    %v37 = vld [vmem:[#allocation6] sm:$0xff]
    %v38 = vld [vmem:[#allocation6 + $0x8] sm:$0xff]
    %v41 = vcombine.high %v37, %v37
    %v42 = vcombine.high %v38, %v38
    %vm45 = vcmask 1043456
    %v46 = vsel %vm45, %v37, 0.0
    %v47 = vrot.slane %v46, 4
    %v48 = vadd.f32 %v46, %v47
    %v49 = vrot.slane %v48, 2
    %v50 = vadd.f32 %v48, %v49
    %v51 = vrot.slane %v50, 1
    %v52 = vadd.f32 %v50, %v51
    %v53 = vsel %vm45, %v41, 0.0
    %v54 = vrot.slane %v53, 4
    %v55 = vadd.f32 %v53, %v54
    %v56 = vrot.slane %v55, 2
    %v57 = vadd.f32 %v55, %v56
    %v58 = vrot.slane %v57, 1
    %v59 = vadd.f32 %v57, %v58
    %v60 = vsel %vm45, %v38, 0.0
    %v61 = vrot.slane %v60, 4
    %v62 = vadd.f32 %v60, %v61
    %v63 = vrot.slane %v62, 2
    %v64 = vadd.f32 %v62, %v63
    %v65 = vrot.slane %v64, 1
    %v66 = vadd.f32 %v64, %v65
    %v67 = vsel %vm45, %v42, 0.0
    %v68 = vrot.slane %v67, 4
    %v69 = vadd.f32 %v67, %v68
    %v70 = vrot.slane %v69, 2
    %v71 = vadd.f32 %v69, %v70
    %v72 = vrot.slane %v71, 1
    %v73 = vadd.f32 %v71, %v72
    %v74 = vrcp.pop 4.0
    %v75 = vmul.f32 %v52, %v74
    %v76 = vmul.f32 %v59, %v74
    %v77 = vmul.f32 %v66, %v74
    %v78 = vmul.f32 %v73, %v74
    %v79 = vsel %vm45, %v37, -inf
    %v80 = vrot.slane %v79, 4
    %v81 = vmax.f32 %v79, %v80
    %v82 = vrot.slane %v81, 2
    %v83 = vmax.f32 %v81, %v82
    %v84 = vrot.slane %v83, 1
    %v85 = vmax.f32 %v83, %v84
    %v86 = vsel %vm45, %v41, -inf
    %v87 = vrot.slane %v86, 4
    %v88 = vmax.f32 %v86, %v87
    %v89 = vrot.slane %v88, 2
    %v90 = vmax.f32 %v88, %v89
    %v91 = vrot.slane %v90, 1
    %v92 = vmax.f32 %v90, %v91
    %v93 = vsel %vm45, %v38, -inf
    %v94 = vrot.slane %v93, 4
    %v95 = vmax.f32 %v93, %v94
    %v96 = vrot.slane %v95, 2
    %v97 = vmax.f32 %v95, %v96
    %v98 = vrot.slane %v97, 1
    %v99 = vmax.f32 %v97, %v98
    %v100 = vsel %vm45, %v42, -inf
    %v101 = vrot.slane %v100, 4
    %v102 = vmax.f32 %v100, %v101
    %v103 = vrot.slane %v102, 2
    %v104 = vmax.f32 %v102, %v103
    %v105 = vrot.slane %v104, 1
    %v106 = vmax.f32 %v104, %v105
    %v107 = vlaneseq
    %v108 = vand.u32 %v107, 127
    %v109 = vadd.s32 %v108, 128
    %vm110 = vcmp.lt.s32.totalorder %v108, 0
    %v111 = vsub.s32 0, %v108
    %v112 = vsel %vm110, %v111, %v108
    %v113 = vshrl.u32 %v112, 4
    %v114 = vand.u32 %v112, 15
    %v115 = vsub.s32 0, %v114
    %v116 = vsel %vm110, %v115, %v114
    %vm117 = vcmp.lt.s32.totalorder %v109, 0
    %v118 = vsub.s32 0, %v109
    %v119 = vsel %vm117, %v118, %v109
    %v120 = vshrl.u32 %v119, 4
    %v121 = vand.u32 %v119, 15
    %v122 = vsub.s32 0, %v121
    %v123 = vsel %vm117, %v122, %v121
    %vm124 = vcmp.ne.s32.totalorder %v116, 0
    %vm125 = vcmp.ne.s32.totalorder %v123, 0
    %vm126 = vcmp.lt.s32.totalorder %v116, 0
    %vm127 = vcmp.lt.s32.totalorder %v123, 0
    %vm128 = vmand %vm126, %vm124
    %vm129 = vmand %vm127, %vm125
    %v130 = vadd.s32 %v116, 16
    %v131 = vadd.s32 %v123, 16
    %v132 = vsel %vm128, %v130, %v116
    %v133 = vsel %vm129, %v131, %v123
    %s134 = sld [smem:[#allocation2]]
    %s135 = sld [smem:[#allocation2 + $0x1]]
    %s136 = sld [smem:[#allocation2 + $0x2]]
    %s137 = sld [smem:[#allocation2 + $0x3]]
    %s138 = sld [smem:[#allocation2 + $0x4]]
    %s139 = sld [smem:[#allocation2 + $0x5]]
    %s140 = sld [smem:[#allocation2 + $0x6]]
    %s141 = sld [smem:[#allocation2 + $0x7]]
    %s142 = sld [smem:[#allocation2 + $0x8]]
    %s143 = sld [smem:[#allocation2 + $0x9]]
    %s144 = sld [smem:[#allocation2 + $0xa]]
    %s145 = sld [smem:[#allocation2 + $0xb]]
    %s146 = sld [smem:[#allocation2 + $0xc]]
    %s147 = sld [smem:[#allocation2 + $0xd]]
    %s148 = sld [smem:[#allocation2 + $0xe]]
    %s149 = sld [smem:[#allocation2 + $0xf]]
    %s150 = sld [smem:[#allocation2 + $0x10]]
    %s151 = sld [smem:[#allocation2 + $0x11]]
    %vm156 = vcmask 1041409
    %v157 = vsel %vm156, %v77, %v75
    %v158 = vsel %vm156, %v78, %v76
    %161 = vrot.lane.b32.xlu0 %v157, 17
    %v162 = vpop.permute.xlu0 %161
    %163 = vrot.lane.b32.xlu0 %v158, 17
    %v164 = vpop.permute.xlu0 %163
    %vm165 = vcmp.lt.s32.totalorder %v108, 17
    %v166 = vsel %vm165, %v162, %v164
    %v167 = vsel %vm165, %v164, %v162
    %v168 = vstv %s134
    %v169 = vmul.f32 %v168, %v167
    %v170 = vmul.f32 %v168, %v166
    %v175 = vsel %vm156, %v99, %v85
    %v176 = vsel %vm156, %v106, %v92
    %179 = vrot.lane.b32.xlu0 %v175, 17
    %v180 = vpop.permute.xlu0 %179
    %181 = vrot.lane.b32.xlu0 %v176, 17
    %v182 = vpop.permute.xlu0 %181
    %v183 = vsel %vm165, %v180, %v182
    %v184 = vsel %vm165, %v182, %v180
    %v185 = vstv %s143
    %v186 = vmul.f32 %v185, %v184
    %v187 = vmul.f32 %v185, %v183
    %v188 = vadd.f32 %v169, %v186
    %v189 = vadd.f32 %v170, %v187
    %vm190 = vcmp.ge.s32.totalorder %v108, 16
    %vm191 = vcmp.ge.s32.totalorder %v109, 16
    %vm192 = vcmp.ge.s32.totalorder %v132, 1
    %vm193 = vcmp.ge.s32.totalorder %v133, 1
    %vm194 = vmand %vm190, %vm192
    %vm195 = vmand %vm191, %vm193
    %v196 = vsel %vm194, %v188, 0.0
    %v197 = vsel %vm195, %v189, 0.0
    %198 = vrot.lane.b32.xlu0 %v157, 16
    %v199 = vpop.permute.xlu0 %198
    %200 = vrot.lane.b32.xlu0 %v158, 16
    %v201 = vpop.permute.xlu0 %200
    %vm202 = vcmp.lt.s32.totalorder %v108, 16
    %v203 = vsel %vm202, %v199, %v201
    %v204 = vsel %vm202, %v201, %v199
    %v205 = vstv %s135
    %v206 = vmul.f32 %v205, %v204
    %v207 = vmul.f32 %v205, %v203
    %208 = vrot.lane.b32.xlu0 %v175, 16
    %v209 = vpop.permute.xlu0 %208
    %210 = vrot.lane.b32.xlu0 %v176, 16
    %v211 = vpop.permute.xlu0 %210
    %v212 = vsel %vm202, %v209, %v211
    %v213 = vsel %vm202, %v211, %v209
    %v214 = vstv %s144
    %v215 = vmul.f32 %v214, %v213
    %v216 = vmul.f32 %v214, %v212
    %v217 = vadd.f32 %v206, %v215
    %v218 = vadd.f32 %v207, %v216
    %v219 = vsel %vm190, %v217, 0.0
    %v220 = vsel %vm191, %v218, 0.0
    %221 = vrot.lane.b32.xlu0 %v157, 15
    %v222 = vpop.permute.xlu0 %221
    %223 = vrot.lane.b32.xlu0 %v158, 15
    %v224 = vpop.permute.xlu0 %223
    %vm225 = vcmp.lt.s32.totalorder %v108, 15
    %v226 = vsel %vm225, %v222, %v224
    %v227 = vsel %vm225, %v224, %v222
    %v228 = vstv %s136
    %v229 = vmul.f32 %v228, %v227
    %v230 = vmul.f32 %v228, %v226
    %231 = vrot.lane.b32.xlu0 %v175, 15
    %v232 = vpop.permute.xlu0 %231
    %233 = vrot.lane.b32.xlu0 %v176, 15
    %v234 = vpop.permute.xlu0 %233
    %v235 = vsel %vm225, %v232, %v234
    %v236 = vsel %vm225, %v234, %v232
    %v237 = vstv %s145
    %v238 = vmul.f32 %v237, %v236
    %v239 = vmul.f32 %v237, %v235
    %v240 = vadd.f32 %v229, %v238
    %v241 = vadd.f32 %v230, %v239
    %vm242 = vcmp.lt.s32.totalorder %v132, 15
    %vm243 = vcmp.lt.s32.totalorder %v133, 15
    %vm244 = vmand %vm190, %vm242
    %vm245 = vmand %vm191, %vm243
    %v246 = vsel %vm244, %v240, 0.0
    %v247 = vsel %vm245, %v241, 0.0
    %248 = vrot.lane.b32.xlu0 %v157, 1
    %v249 = vpop.permute.xlu0 %248
    %250 = vrot.lane.b32.xlu0 %v158, 1
    %v251 = vpop.permute.xlu0 %250
    %vm252 = vcmp.lt.s32.totalorder %v108, 1
    %v253 = vsel %vm252, %v249, %v251
    %v254 = vsel %vm252, %v251, %v249
    %v255 = vstv %s137
    %v256 = vmul.f32 %v255, %v254
    %v257 = vmul.f32 %v255, %v253
    %258 = vrot.lane.b32.xlu0 %v175, 1
    %v259 = vpop.permute.xlu0 %258
    %260 = vrot.lane.b32.xlu0 %v176, 1
    %v261 = vpop.permute.xlu0 %260
    %v262 = vsel %vm252, %v259, %v261
    %v263 = vsel %vm252, %v261, %v259
    %v264 = vstv %s146
    %v265 = vmul.f32 %v264, %v263
    %v266 = vmul.f32 %v264, %v262
    %v267 = vadd.f32 %v256, %v265
    %v268 = vadd.f32 %v257, %v266
    %v269 = vsel %vm192, %v267, 0.0
    %v270 = vsel %vm193, %v268, 0.0
    %v271 = vstv %s138
    %v272 = vmul.f32 %v271, %v75
    %v273 = vmul.f32 %v271, %v76
    %v274 = vmul.f32 %v271, %v77
    %v275 = vmul.f32 %v271, %v78
    %v276 = vstv %s147
    %v277 = vmul.f32 %v276, %v85
    %v278 = vmul.f32 %v276, %v92
    %v279 = vmul.f32 %v276, %v99
    %v280 = vmul.f32 %v276, %v106
    %v281 = vadd.f32 %v272, %v277
    %v282 = vadd.f32 %v273, %v278
    %v283 = vadd.f32 %v274, %v279
    %v284 = vadd.f32 %v275, %v280
    %285 = vrot.lane.b32.xlu0 %v157, 127
    %v286 = vpop.permute.xlu0 %285
    %287 = vrot.lane.b32.xlu0 %v158, 127
    %v288 = vpop.permute.xlu0 %287
    %vm289 = vcmp.lt.s32.totalorder %v108, 127
    %v290 = vsel %vm289, %v286, %v288
    %v291 = vsel %vm289, %v288, %v286
    %v292 = vstv %s139
    %v293 = vmul.f32 %v292, %v290
    %v294 = vmul.f32 %v292, %v291
    %295 = vrot.lane.b32.xlu0 %v175, 127
    %v296 = vpop.permute.xlu0 %295
    %297 = vrot.lane.b32.xlu0 %v176, 127
    %v298 = vpop.permute.xlu0 %297
    %v299 = vsel %vm289, %v296, %v298
    %v300 = vsel %vm289, %v298, %v296
    %v301 = vstv %s148
    %v302 = vmul.f32 %v301, %v299
    %v303 = vmul.f32 %v301, %v300
    %v304 = vadd.f32 %v293, %v302
    %v305 = vadd.f32 %v294, %v303
    %v306 = vsel %vm242, %v304, 0.0
    %v307 = vsel %vm243, %v305, 0.0
    %308 = vrot.lane.b32.xlu0 %v157, 113
    %v309 = vpop.permute.xlu0 %308
    %310 = vrot.lane.b32.xlu0 %v158, 113
    %v311 = vpop.permute.xlu0 %310
    %vm312 = vcmp.lt.s32.totalorder %v108, 113
    %v313 = vsel %vm312, %v309, %v311
    %v314 = vsel %vm312, %v311, %v309
    %v315 = vstv %s140
    %v316 = vmul.f32 %v315, %v313
    %v317 = vmul.f32 %v315, %v314
    %318 = vrot.lane.b32.xlu0 %v175, 113
    %v319 = vpop.permute.xlu0 %318
    %320 = vrot.lane.b32.xlu0 %v176, 113
    %v321 = vpop.permute.xlu0 %320
    %v322 = vsel %vm312, %v319, %v321
    %v323 = vsel %vm312, %v321, %v319
    %v324 = vstv %s149
    %v325 = vmul.f32 %v324, %v322
    %v326 = vmul.f32 %v324, %v323
    %v327 = vadd.f32 %v316, %v325
    %v328 = vadd.f32 %v317, %v326
    %vm329 = vcmp.lt.s32.totalorder %v108, 240
    %vm330 = vcmp.lt.s32.totalorder %v109, 240
    %vm331 = vmand %vm329, %vm192
    %vm332 = vmand %vm330, %vm193
    %v333 = vsel %vm331, %v327, 0.0
    %v334 = vsel %vm332, %v328, 0.0
    %335 = vrot.lane.b32.xlu0 %v157, 112
    %v336 = vpop.permute.xlu0 %335
    %337 = vrot.lane.b32.xlu0 %v158, 112
    %v338 = vpop.permute.xlu0 %337
    %vm339 = vcmp.lt.s32.totalorder %v108, 112
    %v340 = vsel %vm339, %v336, %v338
    %v341 = vsel %vm339, %v338, %v336
    %v342 = vstv %s141
    %v343 = vmul.f32 %v342, %v340
    %v344 = vmul.f32 %v342, %v341
    %345 = vrot.lane.b32.xlu0 %v175, 112
    %v346 = vpop.permute.xlu0 %345
    %347 = vrot.lane.b32.xlu0 %v176, 112
    %v348 = vpop.permute.xlu0 %347
    %v349 = vsel %vm339, %v346, %v348
    %v350 = vsel %vm339, %v348, %v346
    %v351 = vstv %s150
    %v352 = vmul.f32 %v351, %v349
    %v353 = vmul.f32 %v351, %v350
    %v354 = vadd.f32 %v343, %v352
    %v355 = vadd.f32 %v344, %v353
    %v356 = vsel %vm329, %v354, 0.0
    %v357 = vsel %vm330, %v355, 0.0
    %358 = vrot.lane.b32.xlu0 %v157, 111
    %v359 = vpop.permute.xlu0 %358
    %360 = vrot.lane.b32.xlu0 %v158, 111
    %v361 = vpop.permute.xlu0 %360
    %vm362 = vcmp.lt.s32.totalorder %v108, 111
    %v363 = vsel %vm362, %v359, %v361
    %v364 = vsel %vm362, %v361, %v359
    %v365 = vstv %s142
    %v366 = vmul.f32 %v365, %v363
    %v367 = vmul.f32 %v365, %v364
    %368 = vrot.lane.b32.xlu0 %v175, 111
    %v369 = vpop.permute.xlu0 %368
    %370 = vrot.lane.b32.xlu0 %v176, 111
    %v371 = vpop.permute.xlu0 %370
    %v372 = vsel %vm362, %v369, %v371
    %v373 = vsel %vm362, %v371, %v369
    %v374 = vstv %s151
    %v375 = vmul.f32 %v374, %v372
    %v376 = vmul.f32 %v374, %v373
    %v377 = vadd.f32 %v366, %v375
    %v378 = vadd.f32 %v367, %v376
    %vm379 = vmand %vm329, %vm242
    %vm380 = vmand %vm330, %vm243
    %v381 = vsel %vm379, %v377, 0.0
    %v382 = vsel %vm380, %v378, 0.0
    %v383 = vadd.f32 %v196, %v219
    %v384 = vadd.f32 %v197, %v220
    %v385 = vadd.f32 %v246, %v269
    %v386 = vadd.f32 %v247, %v270
    %v389 = vrot.slane %v306, 1
    %v390 = vrot.slane %v307, 1
    %v395 = vadd.f32 %v281, %v306
    %v396 = vadd.f32 %v282, %v307
    %v397 = vadd.f32 %v283, %v389
    %v398 = vadd.f32 %v284, %v390
    %v399 = vadd.f32 %v333, %v356
    %v400 = vadd.f32 %v334, %v357
    %v401 = vadd.f32 %v383, %v385
    %v402 = vadd.f32 %v384, %v386
    %v405 = vrot.slane %v399, 1
    %v406 = vrot.slane %v400, 1
    %v411 = vadd.f32 %v395, %v399
    %v412 = vadd.f32 %v396, %v400
    %v413 = vadd.f32 %v397, %v405
    %v414 = vadd.f32 %v398, %v406
    %v419 = vrot.slane %v413, 7
    %v420 = vsel %vm156, %v419, %v411
    %v421 = vrot.slane %v414, 7
    %v422 = vsel %vm156, %v421, %v412
    %v425 = vadd.f32 %v401, %v420
    %v426 = vadd.f32 %v402, %v422
    %v427 = vadd.f32 %v425, %v381
    %v428 = vadd.f32 %v426, %v382
    %v431 = vcombine.low %v427, %v428
    %v433 = vunpack.c.l.s4 1983009808
    %v434 = vunpack.c.0.s8 %v433
    %v435 = vlaneseq
    %v436 = vshrl.u32 %v435, 7
    %v437 = vsub.s32 %v434, %v436
    %v438 = vrot.slane %v431, %v437
    %440 = vst [vmem:[#allocation7] sm:$0xf] %v438
    // Predicated region
    $region18: #{tpu_custom_call.1} parent=1 // pred_check
      _
    $region19: #{tpu_custom_call.1} parent=1 // pred_check_branch
      %442 = sbr.rel (0) target = $region21
    $region20: #{tpu_custom_call.1} parent=1 // pred_region
      %s444 = ssub.s32 64, 64
      %445 = vsyncadd [#allocation4], %s444
      %s447 = sshll.u32 [#allocation7], 4
      %s448 = int_to_ptr.vmem [resolvable:$true] %s447
      %450 = dma.vmem_to_hbm [thread:$0]  %s448, 64, %s2, [#allocation4]
    $region21: #{tpu_custom_call.1} parent=1 // pred_fallthru
      _
    // Predicated region
    $region22: #{tpu_custom_call.1} parent=1 // pred_check
      _
    $region23: #{tpu_custom_call.1} parent=1 // pred_check_branch
      %452 = sbr.rel (0) target = $region25
    $region24: #{tpu_custom_call.1} parent=1 // pred_region
      %453 = dma.done [#allocation4], 64
    $region25: #{tpu_custom_call.1} parent=1 // pred_fallthru
      _
    %454 = vsyncpa [#allocation3], 1
    %455 = vsyncpa [#allocation4], 1
    %456 = vsyncpa [#allocation5], 1

</llo_original>
